<compile_context>
chip_gen: v7x
topology: tpu7x:2x2x1
jax: 0.10.0
libtpu: 0.0.40
codegen_flags: <defaults>
</compile_context>

<pallas_src>
import functools

import jax
import jax.numpy as jnp
from jax.experimental import pallas as pl
from jax.experimental.pallas import tpu as pltpu

LANES = 128
HIDDEN = 64


def _round_up(n, m):
    return ((n + m - 1) // m) * m


def dqn_mlp_kernel(x_ref, w_ref, o_ref, *, d_in, n_actions):
    # x_ref : (blk, d_in)       raw features at natural width
    # w_ref : (3, 128, 128)     packed (W | bias row | ones-propagator) per layer
    # o_ref : (blk, n_actions)  Q-values
    x = x_ref[...].astype(jnp.float32)                      # (blk, d_in)
    blk = x.shape[0]

    # ---- Layer 1 on the VPU: K = d_in is tiny, the MXU buys nothing here. ----
    w1 = w_ref[0]                                           # (128, 128)
    # Start from the bias row (contains b1 in [:HIDDEN] and 1.0 at lane HIDDEN,
    # which becomes the "ones column" that carries biases through layers 2/3).
    h1 = jnp.broadcast_to(w1[d_in:d_in + 1, :], (blk, LANES))
    for k in range(d_in):                                   # unrolled at trace time
        h1 = h1 + x[:, k:k + 1] * w1[k:k + 1, :]
    h1 = jnp.maximum(h1, 0.0)                               # ReLU; lane HIDDEN stays 1.0

    # ---- Layers 2 & 3: single 128x128 MXU passes, biases folded via the ones column. ----
    h2 = jnp.maximum(
        jnp.dot(h1, w_ref[1], preferred_element_type=jnp.float32), 0.0)
    q = jnp.dot(h2, w_ref[2], preferred_element_type=jnp.float32)

    o_ref[...] = q[:, :n_actions].astype(o_ref.dtype)


def pack_weight_slab(params, input_dim, n_actions, hidden=HIDDEN):
    """Pack W1/b1, W2/b2, W3/b3 into one zero-padded (3, 128, 128) f32 slab.

    Bias rows sit at row `input_dim` (layer 1) / row `hidden` (layers 2, 3).
    A 1.0 at [layer, bias_row, hidden] creates / propagates the ones column in
    the activations so layers 2 and 3 get their bias folded into the matmul.
    """
    assert input_dim < LANES and hidden < LANES and n_actions <= LANES
    slab = jnp.zeros((3, LANES, LANES), jnp.float32)
    # Layer 1
    slab = slab.at[0, :input_dim, :hidden].set(params["w1"])
    slab = slab.at[0, input_dim, :hidden].set(params["b1"].reshape(-1))
    slab = slab.at[0, input_dim, hidden].set(1.0)      # plant ones column
    # Layer 2
    slab = slab.at[1, :hidden, :hidden].set(params["w2"])
    slab = slab.at[1, hidden, :hidden].set(params["b2"].reshape(-1))
    slab = slab.at[1, hidden, hidden].set(1.0)         # keep ones column alive
    # Layer 3
    slab = slab.at[2, :hidden, :n_actions].set(params["w3"])
    slab = slab.at[2, hidden, :n_actions].set(params["b3"].reshape(-1))
    return slab


@functools.partial(jax.jit, static_argnames=("n_actions", "block_b"))
def dqn_cartpole_forward(x, w_slab, *, n_actions, block_b=1024):
    """x: (B, input_dim) float. w_slab: (3, 128, 128) packed weights+biases."""
    B, d_in = x.shape
    b_aligned = _round_up(B, 8)
    blk = min(block_b, b_aligned)                 # batch tile (multiple of 8)
    # v7x megacore: keep >= 2 grid steps for large batches so both TCs get work.
    if b_aligned > 1024 and 2 * blk > b_aligned:
        blk = _round_up(-(-b_aligned // 2), 8)
    b_pad = _round_up(B, blk)
    nb = b_pad // blk

    x_in = x.astype(jnp.float32)
    if b_pad != B:
        x_in = jnp.pad(x_in, ((0, b_pad - B), (0, 0)))   # tiny: d_in lanes only

    kernel = functools.partial(dqn_mlp_kernel, d_in=d_in, n_actions=n_actions)
    q = pl.pallas_call(
        kernel,
        out_shape=jax.ShapeDtypeStruct((b_pad, n_actions), jnp.float32),
        grid=(nb,),
        in_specs=[
            # Natural-width input block: last dim == full array extent (legal).
            pl.BlockSpec((blk, d_in), lambda i: (i, 0)),
            # Whole network in one slab; constant block index -> VMEM-resident.
            pl.BlockSpec((3, LANES, LANES), lambda i: (0, 0, 0)),
        ],
        # Narrow output: only n_actions lanes ever hit HBM.
        out_specs=pl.BlockSpec((blk, n_actions), lambda i: (i, 0)),
        compiler_params=pltpu.CompilerParams(
            dimension_semantics=("parallel",),
            # Only needed for very fat tiles (v5e's scoped default is 16 MiB).
            vmem_limit_bytes=(32 * 1024 * 1024 if blk > 2048 else None),
        ),
    )(x_in, w_slab)

    return q[:B] if b_pad != B else q


def init_params(key, input_dim, n_actions, hidden=HIDDEN):
    """Deterministic init mimicking nn.Linear's U(-1/sqrt(fan_in), 1/sqrt(fan_in))."""
    ks = jax.random.split(key, 6)

    def linear(kw, kb, fan_in, fan_out):
        bound = 1.0 / jnp.sqrt(jnp.float32(fan_in))
        w = jax.random.uniform(kw, (fan_in, fan_out), jnp.float32, -bound, bound)
        b = jax.random.uniform(kb, (1, fan_out), jnp.float32, -bound, bound)
        return w, b

    w1, b1 = linear(ks[0], ks[1], input_dim, hidden)
    w2, b2 = linear(ks[2], ks[3], hidden, hidden)
    w3, b3 = linear(ks[4], ks[5], hidden, n_actions)
    return {"w1": w1, "b1": b1, "w2": w2, "b2": b2, "w3": w3, "b3": b3}


def reference_forward(x, p):
    h1 = jnp.maximum(x @ p["w1"] + p["b1"], 0.0)
    h2 = jnp.maximum(h1 @ p["w2"] + p["b2"], 0.0)
    return h2 @ p["w3"] + p["b3"]


if __name__ == "__main__":
    key = jax.random.PRNGKey(0)
    k_param, k_x1, k_x2 = jax.random.split(key, 3)

    # CartPole-v1: observation dim = 4, actions = 2.
    input_dim, n_actions = 4, 2
    params = init_params(k_param, input_dim, n_actions)
    w_slab = pack_weight_slab(params, input_dim, n_actions)

    # Small single-block batch (acting path).
    x_small = jax.random.normal(k_x1, (8, input_dim), jnp.float32)
    out_small = jax.block_until_ready(
        dqn_cartpole_forward(x_small, w_slab, n_actions=n_actions))
    ref_small = reference_forward(x_small, params)
    assert out_small.shape == (8, n_actions)
    assert jnp.allclose(out_small, ref_small, atol=1e-4, rtol=1e-4)

    # Batch that exercises the batch grid axis + tail padding.
    x_batch = jax.random.normal(k_x2, (40, input_dim), jnp.float32)
    out_batch = jax.block_until_ready(
        dqn_cartpole_forward(x_batch, w_slab, n_actions=n_actions, block_b=16))
    ref_batch = reference_forward(x_batch, params)
    assert out_batch.shape == (40, n_actions)
    assert jnp.allclose(out_batch, ref_batch, atol=1e-4, rtol=1e-4)

    print("KERNEL_OK")
</pallas_src>

<mosaic_0001>
module attributes {stable_mosaic.version = 11 : i64} {
  func.func @dqn_mlp_kernel(%arg0: i32, %arg1: memref<8x4xf32, #tpu.memory_space<vmem>>, %arg2: memref<3x128x128xf32, #tpu.memory_space<vmem>>, %arg3: memref<8x2xf32, #tpu.memory_space<vmem>>) attributes {dimension_semantics = [#tpu.dimension_semantics<parallel>], iteration_bounds = array<i64: 1>, scalar_prefetch = 0 : i64, scratch_operands = 0 : i64, tpu.core_type = #tpu.core_type<tc>, window_params = [{transform_indices = @transform_0, window_bounds = array<i64: 8, 4>}, {pipeline_mode = #tpu.pipeline_mode<synchronous>, transform_indices = @transform_1, window_bounds = array<i64: 3, 128, 128>}, {transform_indices = @transform_2, window_bounds = array<i64: 8, 2>}]} {
    %c0 = arith.constant 0 : index
    %c0_0 = arith.constant 0 : index
    %0 = vector.load %arg1[%c0, %c0_0] : memref<8x4xf32, #tpu.memory_space<vmem>>, vector<8x4xf32>
    %c0_1 = arith.constant 0 : index
    %c0_2 = arith.constant 0 : index
    %c0_3 = arith.constant 0 : index
    %1 = vector.load %arg2[%c0_1, %c0_2, %c0_3] : memref<3x128x128xf32, #tpu.memory_space<vmem>>, vector<1x128x128xf32>
    %2 = vector.shape_cast %1 : vector<1x128x128xf32> to vector<128x128xf32>
    %3 = vector.extract_strided_slice %2 {offsets = [4, 0], sizes = [1, 128], strides = [1, 1]} : vector<128x128xf32> to vector<1x128xf32>
    %4 = vector.shape_cast %3 : vector<1x128xf32> to vector<1x128xf32>
    %5 = vector.broadcast %4 : vector<1x128xf32> to vector<8x128xf32>
    %6 = vector.extract_strided_slice %0 {offsets = [0, 0], sizes = [8, 1], strides = [1, 1]} : vector<8x4xf32> to vector<8x1xf32>
    %7 = vector.extract_strided_slice %2 {offsets = [0, 0], sizes = [1, 128], strides = [1, 1]} : vector<128x128xf32> to vector<1x128xf32>
    %8 = vector.broadcast %6 : vector<8x1xf32> to vector<8x128xf32>
    %9 = vector.broadcast %7 : vector<1x128xf32> to vector<8x128xf32>
    %10 = arith.mulf %8, %9 : vector<8x128xf32>
    %11 = arith.addf %5, %10 : vector<8x128xf32>
    %12 = vector.extract_strided_slice %0 {offsets = [0, 1], sizes = [8, 1], strides = [1, 1]} : vector<8x4xf32> to vector<8x1xf32>
    %13 = vector.extract_strided_slice %2 {offsets = [1, 0], sizes = [1, 128], strides = [1, 1]} : vector<128x128xf32> to vector<1x128xf32>
    %14 = vector.broadcast %12 : vector<8x1xf32> to vector<8x128xf32>
    %15 = vector.broadcast %13 : vector<1x128xf32> to vector<8x128xf32>
    %16 = arith.mulf %14, %15 : vector<8x128xf32>
    %17 = arith.addf %11, %16 : vector<8x128xf32>
    %18 = vector.extract_strided_slice %0 {offsets = [0, 2], sizes = [8, 1], strides = [1, 1]} : vector<8x4xf32> to vector<8x1xf32>
    %19 = vector.extract_strided_slice %2 {offsets = [2, 0], sizes = [1, 128], strides = [1, 1]} : vector<128x128xf32> to vector<1x128xf32>
    %20 = vector.broadcast %18 : vector<8x1xf32> to vector<8x128xf32>
    %21 = vector.broadcast %19 : vector<1x128xf32> to vector<8x128xf32>
    %22 = arith.mulf %20, %21 : vector<8x128xf32>
    %23 = arith.addf %17, %22 : vector<8x128xf32>
    %24 = vector.extract_strided_slice %0 {offsets = [0, 3], sizes = [8, 1], strides = [1, 1]} : vector<8x4xf32> to vector<8x1xf32>
    %25 = vector.extract_strided_slice %2 {offsets = [3, 0], sizes = [1, 128], strides = [1, 1]} : vector<128x128xf32> to vector<1x128xf32>
    %26 = vector.broadcast %24 : vector<8x1xf32> to vector<8x128xf32>
    %27 = vector.broadcast %25 : vector<1x128xf32> to vector<8x128xf32>
    %28 = arith.mulf %26, %27 : vector<8x128xf32>
    %29 = arith.addf %23, %28 : vector<8x128xf32>
    %cst = arith.constant 0.000000e+00 : f32
    %30 = vector.broadcast %cst : f32 to vector<8x128xf32>
    %31 = arith.maximumf %29, %30 : vector<8x128xf32>
    %c1 = arith.constant 1 : index
    %c0_4 = arith.constant 0 : index
    %c0_5 = arith.constant 0 : index
    %32 = vector.load %arg2[%c1, %c0_4, %c0_5] : memref<3x128x128xf32, #tpu.memory_space<vmem>>, vector<1x128x128xf32>
    %33 = vector.shape_cast %32 : vector<1x128x128xf32> to vector<128x128xf32>
    %cst_6 = arith.constant dense<0.000000e+00> : vector<8x128xf32>
    %34 = tpu.matmul %31, %33, %cst_6 {dimension_numbers = #tpu.dot_dimension_numbers<[1], [0], [0], [1], [0, 0, 1, 1], [], []>} : vector<8x128xf32>, vector<128x128xf32>, vector<8x128xf32> -> vector<8x128xf32>
    %cst_7 = arith.constant 0.000000e+00 : f32
    %35 = vector.broadcast %cst_7 : f32 to vector<8x128xf32>
    %36 = arith.maximumf %34, %35 : vector<8x128xf32>
    %c2 = arith.constant 2 : index
    %c0_8 = arith.constant 0 : index
    %c0_9 = arith.constant 0 : index
    %37 = vector.load %arg2[%c2, %c0_8, %c0_9] : memref<3x128x128xf32, #tpu.memory_space<vmem>>, vector<1x128x128xf32>
    %38 = vector.shape_cast %37 : vector<1x128x128xf32> to vector<128x128xf32>
    %cst_10 = arith.constant dense<0.000000e+00> : vector<8x128xf32>
    %39 = tpu.matmul %36, %38, %cst_10 {dimension_numbers = #tpu.dot_dimension_numbers<[1], [0], [0], [1], [0, 0, 1, 1], [], []>} : vector<8x128xf32>, vector<128x128xf32>, vector<8x128xf32> -> vector<8x128xf32>
    %40 = vector.extract_strided_slice %39 {offsets = [0, 0], sizes = [8, 2], strides = [1, 1]} : vector<8x128xf32> to vector<8x2xf32>
    %c0_11 = arith.constant 0 : index
    %c0_12 = arith.constant 0 : index
    %41 = vector.load %arg3[%c0_11, %c0_12] : memref<8x2xf32, #tpu.memory_space<vmem>>, vector<8x2xf32>
    tpu.vector_store %arg3[%c0_11, %c0_12], %40 {strides = array<i32>} : memref<8x2xf32, #tpu.memory_space<vmem>>, vector<8x2xf32>,
    return
  }
  func.func @transform_0(%arg0: i32) -> (i32, i32) {
    %c0_i32 = arith.constant 0 : i32
    %c0_i32_0 = arith.constant 0 : i32
    return %arg0, %c0_i32 : i32, i32
  }
  func.func @transform_1(%arg0: i32) -> (i32, i32, i32) {
    %c0_i32 = arith.constant 0 : i32
    %c0_i32_0 = arith.constant 0 : i32
    %c0_i32_1 = arith.constant 0 : i32
    %c0_i32_2 = arith.constant 0 : i32
    return %c0_i32, %c0_i32_0, %c0_i32_1 : i32, i32, i32
  }
  func.func @transform_2(%arg0: i32) -> (i32, i32) {
    %c0_i32 = arith.constant 0 : i32
    %c0_i32_0 = arith.constant 0 : i32
    return %arg0, %c0_i32 : i32, i32
  }
}

</mosaic_0001>

<llo_original>
// kernel: dqn_cartpole_forward.1
$region0: #{dqn_cartpole_forward.1}
  #allocation0 [shape = 'u32[]', space=smem, size = 0x4, offset = 0x4, fixed_abs, tag = 'smem constant byte address 0x4 - core index']
  #allocation1 [shape = 'u32[144,128]{1,0:T(1,128)}', space=vmem, size = 0x12000, scoped, tag = 'internal scratch']
  %s0 = inlined_call_operand.vmem [shape: f32[8,4], index: 0, kind: input, shape index: {}]
  %s1 = inlined_call_operand.hbm [shape: f32[3,128,128], index: 1, kind: input, shape index: {}]
  %s2 = inlined_call_operand.vmem [shape: f32[8,2], index: 2, kind: output, shape index: {}]
  %s3 = sld [smem:[#allocation0]]
  $region22: #{dqn_cartpole_forward.1} parent=0
    _
  %s5 = ssub.s32 1, %s3
  %s6 = scalar_select 0, %s5, %s3
  $region1: #{dqn_cartpole_forward.1} parent=0
    #allocation2 [shape = 'u8[196608]{0}', space=vmem, size = 0x30000, scoped, tag = 'input window, operand 1, single buffered']
    #allocation3 [shape = 's32[1]{0}', space=sflag, size = 0x4, scoped, tag = 'scoped memory for dqn_cartpole_forward.1']
    %7 = vsyncpa [#allocation3], 0
    // Predicated region
    $region2: #{dqn_cartpole_forward.1} parent=1 // pred_check
      _
    $region3: #{dqn_cartpole_forward.1} parent=1 // pred_check_branch
      %9 = sbr.rel (0) target = $region5
    $region4: #{dqn_cartpole_forward.1} parent=1 // pred_region
      _
    $region5: #{dqn_cartpole_forward.1} parent=1 // pred_fallthru
      _
    // Predicated region
    $region6: #{dqn_cartpole_forward.1} parent=1 // pred_check
      _
    $region7: #{dqn_cartpole_forward.1} parent=1 // pred_check_branch
      %11 = sbr.rel (0) target = $region9
    $region8: #{dqn_cartpole_forward.1} parent=1 // pred_region
      %s13 = ssub.s32 6144, 6144
      %14 = vsyncadd [#allocation3], %s13
      %s15 = sshll.u32 [#allocation2], 4
      %s16 = int_to_ptr.vmem [resolvable:$true] %s15
      %21 = dma.hbm_to_vmem [thread:$0]  %s1, 6144, %s16, [#allocation3], 128, 128, 8
    $region9: #{dqn_cartpole_forward.1} parent=1 // pred_fallthru
      _
    // Predicated region
    $region10: #{dqn_cartpole_forward.1} parent=1 // pred_check
      _
    $region11: #{dqn_cartpole_forward.1} parent=1 // pred_check_branch
      %23 = sbr.rel (0) target = $region13
    $region12: #{dqn_cartpole_forward.1} parent=1 // pred_region
      %24 = dma.done [#allocation3], 6144
    $region13: #{dqn_cartpole_forward.1} parent=1 // pred_fallthru
      _
    %v25 = vld [vmem:[%s0] sm:$0xff]
    %v26 = vld [vmem:[#allocation2] sm:$0xff]
    %v27 = vlaneseq
    %v28 = vshrl.u32 %v27, 7
    %v29 = vsub.s32 4, %v28
    %v30 = vrot.slane %v26, %v29
    %32 = vset.pattern.permute.xlu0 0
    %33 = vperm.xlu0 %32, %v25
    %v34 = vpop.permute.xlu0 %33
    %v36 = vlaneseq
    %v37 = vshrl.u32 %v36, 7
    %v38 = vsub.s32 0, %v37
    %v39 = vrot.slane %v26, %v38
    %v40 = vmul.f32 %v34, %v39
    %v41 = vadd.f32 %v30, %v40
    %42 = vset.pattern.permute.xlu0 1
    %43 = vperm.xlu0 %42, %v25
    %v44 = vpop.permute.xlu0 %43
    %v46 = vlaneseq
    %v47 = vshrl.u32 %v46, 7
    %v48 = vsub.s32 1, %v47
    %v49 = vrot.slane %v26, %v48
    %v50 = vmul.f32 %v44, %v49
    %v51 = vadd.f32 %v41, %v50
    %52 = vset.pattern.permute.xlu0 2
    %53 = vperm.xlu0 %52, %v25
    %v54 = vpop.permute.xlu0 %53
    %v56 = vlaneseq
    %v57 = vshrl.u32 %v56, 7
    %v58 = vsub.s32 2, %v57
    %v59 = vrot.slane %v26, %v58
    %v60 = vmul.f32 %v54, %v59
    %v61 = vadd.f32 %v51, %v60
    %62 = vset.pattern.permute.xlu0 3
    %63 = vperm.xlu0 %62, %v25
    %v64 = vpop.permute.xlu0 %63
    %v66 = vlaneseq
    %v67 = vshrl.u32 %v66, 7
    %v68 = vsub.s32 3, %v67
    %v69 = vrot.slane %v26, %v68
    %v70 = vmul.f32 %v64, %v69
    %v71 = vadd.f32 %v61, %v70
    %v72 = vmax.f32 %v71, 0.0
    %s73 = scalar_lea.vmem [#allocation2], 128
    %v74 = vld [vmem:[%s73] sm:$0xff]
    %v75 = vld [vmem:[%s73 + $0x8] sm:$0xff]
    %v76 = vld [vmem:[%s73 + $0x10] sm:$0xff]
    %v77 = vld [vmem:[%s73 + $0x18] sm:$0xff]
    %v78 = vld [vmem:[%s73 + $0x20] sm:$0xff]
    %v79 = vld [vmem:[%s73 + $0x28] sm:$0xff]
    %v80 = vld [vmem:[%s73 + $0x30] sm:$0xff]
    %v81 = vld [vmem:[%s73 + $0x38] sm:$0xff]
    %v82 = vld [vmem:[%s73 + $0x40] sm:$0xff]
    %v83 = vld [vmem:[%s73 + $0x48] sm:$0xff]
    %v84 = vld [vmem:[%s73 + $0x50] sm:$0xff]
    %v85 = vld [vmem:[%s73 + $0x58] sm:$0xff]
    %v86 = vld [vmem:[%s73 + $0x60] sm:$0xff]
    %v87 = vld [vmem:[%s73 + $0x68] sm:$0xff]
    %v88 = vld [vmem:[%s73 + $0x70] sm:$0xff]
    %v89 = vld [vmem:[%s73 + $0x78] sm:$0xff]
    %90 = vmatprep.subr.mxu0 0.0
    %91 = vmatpush1.msra.mxu0 %v74
    %92 = vmatprep.subr.mxu0 0.0
    %93 = vmatpush1.msra.mxu0 %v75
    %94 = vmatprep.subr.mxu0 0.0
    %95 = vmatpush1.msra.mxu0 %v76
    %96 = vmatprep.subr.mxu0 0.0
    %97 = vmatpush1.msra.mxu0 %v77
    %98 = vmatprep.subr.mxu0 0.0
    %99 = vmatpush1.msra.mxu0 %v78
    %100 = vmatprep.subr.mxu0 0.0
    %101 = vmatpush1.msra.mxu0 %v79
    %102 = vmatprep.subr.mxu0 0.0
    %103 = vmatpush1.msra.mxu0 %v80
    %104 = vmatprep.subr.mxu0 0.0
    %105 = vmatpush1.msra.mxu0 %v81
    %106 = vmatprep.subr.mxu0 0.0
    %107 = vmatpush1.msra.mxu0 %v82
    %108 = vmatprep.subr.mxu0 0.0
    %109 = vmatpush1.msra.mxu0 %v83
    %110 = vmatprep.subr.mxu0 0.0
    %111 = vmatpush1.msra.mxu0 %v84
    %112 = vmatprep.subr.mxu0 0.0
    %113 = vmatpush1.msra.mxu0 %v85
    %114 = vmatprep.subr.mxu0 0.0
    %115 = vmatpush1.msra.mxu0 %v86
    %116 = vmatprep.subr.mxu0 0.0
    %117 = vmatpush1.msra.mxu0 %v87
    %118 = vmatprep.subr.mxu0 0.0
    %119 = vmatpush1.msra.mxu0 %v88
    %120 = vmatprep.subr.mxu0 0.0
    %121 = vmatpush1.msra.mxu0 %v89
    %122 = vmatprep.subr.mxu0 0.0
    %123 = vmatpush1.msra.mxu0 0.0
    %124 = vmatprep.subr.mxu0 0.0
    %125 = vmatpush1.msra.mxu0 0.0
    %126 = vmatprep.subr.mxu0 0.0
    %127 = vmatpush1.msra.mxu0 0.0
    %128 = vmatprep.subr.mxu0 0.0
    %129 = vmatpush1.msra.mxu0 0.0
    %130 = vmatprep.subr.mxu0 0.0
    %131 = vmatpush1.msra.mxu0 0.0
    %132 = vmatprep.subr.mxu0 0.0
    %133 = vmatpush1.msra.mxu0 0.0
    %134 = vmatprep.subr.mxu0 0.0
    %135 = vmatpush1.msra.mxu0 0.0
    %136 = vmatprep.subr.mxu0 0.0
    %137 = vmatpush1.msra.mxu0 0.0
    %138 = vmatprep.subr.mxu0 0.0
    %139 = vmatpush1.msra.mxu0 0.0
    %140 = vmatprep.subr.mxu0 0.0
    %141 = vmatpush1.msra.mxu0 0.0
    %142 = vmatprep.subr.mxu0 0.0
    %143 = vmatpush1.msra.mxu0 0.0
    %144 = vmatprep.subr.mxu0 0.0
    %145 = vmatpush1.msra.mxu0 0.0
    %146 = vmatprep.subr.mxu0 0.0
    %147 = vmatpush1.msra.mxu0 0.0
    %148 = vmatprep.subr.mxu0 0.0
    %149 = vmatpush1.msra.mxu0 0.0
    %150 = vmatprep.subr.mxu0 0.0
    %151 = vmatpush1.msra.mxu0 0.0
    %152 = vmatprep.subr.mxu0 0.0
    %153 = vmatpush1.msra.mxu0 0.0
    %154 = vmatprep.mubr.f32.mxu0 0.0
    %155 = vmatmul.mubr.f32.gmra.mrb[0].mxu0 %v72
    %v156 = vpop.f32.mrb[0].mxu0
    %v157 = vadd.f32 0.0, %v156
    %v158 = vpop.f32.mrb[0].mxu0
    %159 = vdwg.mxu0
    %v160 = vmax.f32 %v157, 0.0
    %s161 = scalar_lea.vmem [#allocation2], 256
    %v162 = vld [vmem:[%s161] sm:$0xff]
    %v163 = vld [vmem:[%s161 + $0x8] sm:$0xff]
    %v164 = vld [vmem:[%s161 + $0x10] sm:$0xff]
    %v165 = vld [vmem:[%s161 + $0x18] sm:$0xff]
    %v166 = vld [vmem:[%s161 + $0x20] sm:$0xff]
    %v167 = vld [vmem:[%s161 + $0x28] sm:$0xff]
    %v168 = vld [vmem:[%s161 + $0x30] sm:$0xff]
    %v169 = vld [vmem:[%s161 + $0x38] sm:$0xff]
    %v170 = vld [vmem:[%s161 + $0x40] sm:$0xff]
    %v171 = vld [vmem:[%s161 + $0x48] sm:$0xff]
    %v172 = vld [vmem:[%s161 + $0x50] sm:$0xff]
    %v173 = vld [vmem:[%s161 + $0x58] sm:$0xff]
    %v174 = vld [vmem:[%s161 + $0x60] sm:$0xff]
    %v175 = vld [vmem:[%s161 + $0x68] sm:$0xff]
    %v176 = vld [vmem:[%s161 + $0x70] sm:$0xff]
    %v177 = vld [vmem:[%s161 + $0x78] sm:$0xff]
    %178 = vmatprep.subr.mxu0 0.0
    %179 = vmatpush1.msra.mxu0 %v162
    %180 = vmatprep.subr.mxu0 0.0
    %181 = vmatpush1.msra.mxu0 %v163
    %182 = vmatprep.subr.mxu0 0.0
    %183 = vmatpush1.msra.mxu0 %v164
    %184 = vmatprep.subr.mxu0 0.0
    %185 = vmatpush1.msra.mxu0 %v165
    %186 = vmatprep.subr.mxu0 0.0
    %187 = vmatpush1.msra.mxu0 %v166
    %188 = vmatprep.subr.mxu0 0.0
    %189 = vmatpush1.msra.mxu0 %v167
    %190 = vmatprep.subr.mxu0 0.0
    %191 = vmatpush1.msra.mxu0 %v168
    %192 = vmatprep.subr.mxu0 0.0
    %193 = vmatpush1.msra.mxu0 %v169
    %194 = vmatprep.subr.mxu0 0.0
    %195 = vmatpush1.msra.mxu0 %v170
    %196 = vmatprep.subr.mxu0 0.0
    %197 = vmatpush1.msra.mxu0 %v171
    %198 = vmatprep.subr.mxu0 0.0
    %199 = vmatpush1.msra.mxu0 %v172
    %200 = vmatprep.subr.mxu0 0.0
    %201 = vmatpush1.msra.mxu0 %v173
    %202 = vmatprep.subr.mxu0 0.0
    %203 = vmatpush1.msra.mxu0 %v174
    %204 = vmatprep.subr.mxu0 0.0
    %205 = vmatpush1.msra.mxu0 %v175
    %206 = vmatprep.subr.mxu0 0.0
    %207 = vmatpush1.msra.mxu0 %v176
    %208 = vmatprep.subr.mxu0 0.0
    %209 = vmatpush1.msra.mxu0 %v177
    %210 = vmatprep.subr.mxu0 0.0
    %211 = vmatpush1.msra.mxu0 0.0
    %212 = vmatprep.subr.mxu0 0.0
    %213 = vmatpush1.msra.mxu0 0.0
    %214 = vmatprep.subr.mxu0 0.0
    %215 = vmatpush1.msra.mxu0 0.0
    %216 = vmatprep.subr.mxu0 0.0
    %217 = vmatpush1.msra.mxu0 0.0
    %218 = vmatprep.subr.mxu0 0.0
    %219 = vmatpush1.msra.mxu0 0.0
    %220 = vmatprep.subr.mxu0 0.0
    %221 = vmatpush1.msra.mxu0 0.0
    %222 = vmatprep.subr.mxu0 0.0
    %223 = vmatpush1.msra.mxu0 0.0
    %224 = vmatprep.subr.mxu0 0.0
    %225 = vmatpush1.msra.mxu0 0.0
    %226 = vmatprep.subr.mxu0 0.0
    %227 = vmatpush1.msra.mxu0 0.0
    %228 = vmatprep.subr.mxu0 0.0
    %229 = vmatpush1.msra.mxu0 0.0
    %230 = vmatprep.subr.mxu0 0.0
    %231 = vmatpush1.msra.mxu0 0.0
    %232 = vmatprep.subr.mxu0 0.0
    %233 = vmatpush1.msra.mxu0 0.0
    %234 = vmatprep.subr.mxu0 0.0
    %235 = vmatpush1.msra.mxu0 0.0
    %236 = vmatprep.subr.mxu0 0.0
    %237 = vmatpush1.msra.mxu0 0.0
    %238 = vmatprep.subr.mxu0 0.0
    %239 = vmatpush1.msra.mxu0 0.0
    %240 = vmatprep.subr.mxu0 0.0
    %241 = vmatpush1.msra.mxu0 0.0
    %242 = vmatprep.mubr.f32.mxu0 0.0
    %243 = vmatmul.mubr.f32.gmra.mrb[0].mxu0 %v160
    %v244 = vpop.f32.mrb[0].mxu0
    %v245 = vadd.f32 0.0, %v244
    %v246 = vpop.f32.mrb[0].mxu0
    %247 = vdwg.mxu0
    %vm248 = vcmask 15360
    %249 = vst.msk [vmem:[%s2] sm:$0xff] %vm248, %v245
    // Predicated region
    $region14: #{dqn_cartpole_forward.1} parent=1 // pred_check
      _
    $region15: #{dqn_cartpole_forward.1} parent=1 // pred_check_branch
      %251 = sbr.rel (0) target = $region17
    $region16: #{dqn_cartpole_forward.1} parent=1 // pred_region
      _
    $region17: #{dqn_cartpole_forward.1} parent=1 // pred_fallthru
      _
    // Predicated region
    $region18: #{dqn_cartpole_forward.1} parent=1 // pred_check
      _
    $region19: #{dqn_cartpole_forward.1} parent=1 // pred_check_branch
      %253 = sbr.rel (0) target = $region21
    $region20: #{dqn_cartpole_forward.1} parent=1 // pred_region
      _
    $region21: #{dqn_cartpole_forward.1} parent=1 // pred_fallthru
      _
    %254 = vsyncpa [#allocation3], 1

</llo_original>
